<compile_context>
chip_gen: v7x
topology: tpu7x:2x2x1
jax: 0.10.0
libtpu: 0.0.40
codegen_flags: <defaults>
</compile_context>

<pallas_src>
import functools

import jax
import jax.numpy as jnp
from jax import lax
from jax.experimental import pallas as pl
from jax.experimental.pallas import tpu as pltpu

LANE = 128                       # vreg lane width
SUB = 8                          # f32 sublane count
VREG_ELEMS = SUB * LANE          # 1024 elements = one aligned (8,128) slab
CHUNK_ROWS = 128                 # rows per in-kernel streaming step (64 KiB f32)
TARGET_BLOCK_BYTES = 4 << 20     # ~4 MiB of input per grid step
VMEM_LIMIT_BYTES = 32 << 20      # explicit limit: safe on v5e/v6e/v7x


def _round_up(x, m):
    return ((x + m - 1) // m) * m


def _round_down(x, m):
    return (x // m) * m


def _int_exponent(p):
    """Return p as a Python int if it is an integer >= 1, else None."""
    pf = float(p)
    return int(pf) if pf.is_integer() and pf >= 1 else None


def _abs_pow_f32(x, p):
    """|x|^p for an f32 array; integer p uses only VPU multiplies."""
    ip = _int_exponent(p)
    if ip == 1:
        return jnp.abs(x)
    if ip == 2:
        return x * x
    if ip is not None:
        base = jnp.abs(x)
        result, cur, e = None, base, ip
        while e > 0:                      # exponentiation by squaring (VALU only)
            if e & 1:
                result = cur if result is None else result * cur
            e >>= 1
            if e:
                cur = cur * cur
        return result
    return jnp.abs(x) ** p                # non-integer p -> EUP pow


def _pow_sum_kernel(x_ref, o_ref, *, p, rows, blk, chunk, num_blocks):
    """One grid step: stream a (blk, 128) tile in (chunk, 128) sub-slabs,
    accumulate |x|^p into an (8, 128) f32 partial sum, store once."""
    n_chunks = blk // chunk
    subs = chunk // SUB
    unroll = min(n_chunks, 8)
    zero = jnp.zeros((SUB, LANE), jnp.float32)

    def chunk_vals(k):
        start = pl.multiple_of(k * chunk, chunk)
        x = x_ref[pl.ds(start, chunk), :].astype(jnp.float32)
        return _abs_pow_f32(x, p)

    def accum(k, acc):
        v = chunk_vals(k)
        return acc + v.reshape(subs, SUB, LANE).sum(axis=0)

    needs_mask = (rows % blk) != 0
    if not needs_mask:
        o_ref[...] = lax.fori_loop(0, n_chunks, accum, zero, unroll=unroll)
        return

    last = num_blocks - 1
    valid_last = rows - last * blk        # static: valid rows in the last block
    i = pl.program_id(0)

    @pl.when(i != last)
    def _():                              # interior blocks: unmasked fast path
        o_ref[...] = lax.fori_loop(0, n_chunks, accum, zero, unroll=unroll)

    @pl.when(i == last)
    def _():                              # last block: mask out-of-range rows
        row_iota = lax.broadcasted_iota(jnp.int32, (chunk, LANE), 0)

        def accum_masked(k, acc):
            v = chunk_vals(k)
            v = jnp.where(row_iota + k * chunk < valid_last, v, 0.0)
            return acc + v.reshape(subs, SUB, LANE).sum(axis=0)

        o_ref[...] = lax.fori_loop(0, n_chunks, accum_masked, zero, unroll=unroll)


def _choose_block_rows(rows, itemsize):
    """Pick a block row count: ~TARGET_BLOCK_BYTES per step, multiple of
    CHUNK_ROWS, and >= 2 (even-ish) blocks whenever rows > one chunk so both
    v7x TensorCores get work."""
    target = max(CHUNK_ROWS,
                 _round_down(TARGET_BLOCK_BYTES // (LANE * itemsize), CHUNK_ROWS))
    if rows <= CHUNK_ROWS:
        return max(SUB, _round_down(rows, SUB))
    pairs = pl.cdiv(rows, 2 * target)
    blk = _round_up(pl.cdiv(rows, 2 * pairs), CHUNK_ROWS)
    return min(blk, target)


def _pow_sum_pallas(w: jax.Array, p, block_rows=None, chunk_rows=None) -> jax.Array:
    """Returns sum(|w|^p) as an f32 scalar.

    The lane-aligned bulk (multiple of 128 elements) is reduced by the Pallas
    kernel in the tensor's native dtype; only a <128-element tail (and tensors
    smaller than one vreg) are summed in plain jnp.
    """
    flat = w.reshape(-1)                        # metadata-only, native dtype
    n = flat.shape[0]
    bulk_n = _round_down(n, LANE)               # bulk granularity = one lane row
    if bulk_n < VREG_ELEMS:
        return jnp.sum(_abs_pow_f32(flat.astype(jnp.float32), p))

    rows = bulk_n // LANE
    # For n % 128 == 0 (typical weight matrices) this is a pure metadata
    # reshape of the original buffer -- no prefix-slice copy.
    bulk = (flat if bulk_n == n else flat[:bulk_n]).reshape(rows, LANE)

    itemsize = jnp.dtype(w.dtype).itemsize
    blk = block_rows if block_rows is not None else _choose_block_rows(rows, itemsize)
    chunk = chunk_rows if chunk_rows is not None else min(CHUNK_ROWS, blk)
    assert blk % SUB == 0 and chunk % SUB == 0 and blk % chunk == 0
    num_blocks = pl.cdiv(rows, blk)

    is_int_p = _int_exponent(p) is not None
    ce = pl.CostEstimate(
        flops=(2 if is_int_p else 3) * bulk_n,
        transcendentals=0 if is_int_p else bulk_n,
        bytes_accessed=bulk_n * itemsize + num_blocks * SUB * LANE * 4,
    )

    partials = pl.pallas_call(
        functools.partial(_pow_sum_kernel, p=p, rows=rows, blk=blk,
                          chunk=chunk, num_blocks=num_blocks),
        out_shape=jax.ShapeDtypeStruct((num_blocks * SUB, LANE), jnp.float32),
        grid=(num_blocks,),
        in_specs=[pl.BlockSpec((blk, LANE), lambda i: (i, 0))],
        out_specs=pl.BlockSpec((SUB, LANE), lambda i: (i, 0)),
        compiler_params=pltpu.CompilerParams(
            dimension_semantics=("parallel",),
            vmem_limit_bytes=VMEM_LIMIT_BYTES),
        cost_estimate=ce,
    )(bulk)

    pow_sum = jnp.sum(partials)                 # cross-block + cross-lane reduce in JAX
    if bulk_n != n:                             # only a <128-element tail
        pow_sum = pow_sum + jnp.sum(_abs_pow_f32(flat[bulk_n:].astype(jnp.float32), p))
    return pow_sum


def regularization_forward(named_params, weight_decay: float, p=2) -> jax.Array:
    """JAX/Pallas equivalent of Regularization.forward(model).

    named_params: dict name -> array.  Only entries whose name contains
    'weight' participate (mirrors get_weight()).  Each tensor's p-norm is
    computed (sum-of-powers in the Pallas kernel, p-th root in JAX); the norms
    are summed and scaled by weight_decay.
    """
    assert weight_decay > 0, "param weight_decay can not <=0"
    # TODO(synk): p=0 (torch.norm counts nonzeros) has no clean equivalent; p>=1 supported.
    assert float(p) >= 1.0, "only p >= 1 norms are supported"

    norms = []
    for name, w in named_params.items():
        if "weight" not in name:
            continue
        pow_sum = _pow_sum_pallas(w, p)
        if _int_exponent(p) == 1:
            norms.append(pow_sum)
        elif _int_exponent(p) == 2:
            norms.append(jnp.sqrt(pow_sum))
        else:
            norms.append(pow_sum ** (1.0 / float(p)))
    if not norms:
        return jnp.float32(0.0)
    return weight_decay * jnp.sum(jnp.stack(norms))


def _reference(named_params, weight_decay, p=2):
    loss = jnp.float32(0.0)
    for name, w in named_params.items():
        if "weight" not in name:
            continue
        wf = w.astype(jnp.float32).reshape(-1)
        loss = loss + jnp.sum(jnp.abs(wf) ** p) ** (1.0 / p)
    return weight_decay * loss


if __name__ == "__main__":
    # Synthetic "model": deterministic parameters for a tiny conv + linear net.
    key = jax.random.PRNGKey(0)
    k1, k2, k3, k4, k5, k6 = jax.random.split(key, 6)
    named_params = {
        "conv1.weight": jax.random.normal(k1, (4, 4, 3, 3), jnp.float32),    # < 1 vreg -> jnp path
        "conv1.bias": jax.random.normal(k2, (4,), jnp.float32),              # skipped (no 'weight')
        "fc.weight": jax.random.normal(k3, (32, 4 * 16 * 16), jnp.float32),  # 32768 elems -> 2 blocks
        "fc.bias": jax.random.normal(k4, (32,), jnp.float32),                # skipped (no 'weight')
        "proj.weight": jax.random.normal(k5, (9, 130), jnp.float32),         # ragged: masked bulk + tail
        "emb.weight": jax.random.normal(k6, (300, 128), jnp.float32).astype(jnp.bfloat16),  # bf16 path
    }
    weight_decay = 0.01
    p = 2

    print("---------------regularization weight---------------")
    for name in named_params:
        if "weight" in name:
            print(name)
    print("---------------------------------------------------")

    loss = regularization_forward(named_params, weight_decay, p=p)
    loss = jax.block_until_ready(loss)

    ref = _reference(named_params, weight_decay, p=p)
    assert jnp.allclose(loss, ref, rtol=1e-5, atol=1e-5), (loss, ref)

    # Extra check: exercise the multi-block grid + masked-last-block + multi-chunk
    # streaming path with small override tiles (rows=256, blk=96, chunk=24 -> grid=3,
    # last block has 64 valid of 96 rows).
    w = named_params["fc.weight"]
    ps_small = jax.block_until_ready(_pow_sum_pallas(w, 2, block_rows=96, chunk_rows=24))
    ps_ref = jnp.sum(w.astype(jnp.float32) ** 2)
    assert jnp.allclose(ps_small, ps_ref, rtol=1e-5, atol=1e-5), (ps_small, ps_ref)

    # Extra check: integer p > 2 uses the repeated-multiply path.
    ps_p4 = jax.block_until_ready(_pow_sum_pallas(w, 4))
    ps_p4_ref = jnp.sum(jnp.abs(w.astype(jnp.float32)) ** 4)
    assert jnp.allclose(ps_p4, ps_p4_ref, rtol=1e-4, atol=1e-4), (ps_p4, ps_p4_ref)

    print("KERNEL_OK")
</pallas_src>

<mosaic_0001>
module attributes {stable_mosaic.version = 11 : i64} {
  func.func @_pow_sum_kernel(%arg0: i32, %arg1: memref<128x128xf32, #tpu.memory_space<vmem>>, %arg2: memref<8x128xf32, #tpu.memory_space<vmem>>) attributes {dimension_semantics = [#tpu.dimension_semantics<parallel>], iteration_bounds = array<i64: 2>, scalar_prefetch = 0 : i64, scratch_operands = 0 : i64, tpu.core_type = #tpu.core_type<tc>, window_params = [{transform_indices = @transform_0, window_bounds = array<i64: 128, 128>}, {transform_indices = @transform_1, window_bounds = array<i64: 8, 128>}]} {
    %cst = arith.constant 0.000000e+00 : f32
    %0 = vector.broadcast %cst : f32 to vector<8x128xf32>
    %c0_i32 = arith.constant 0 : i32
    %c128_i32 = arith.constant 128 : i32
    %1 = arith.muli %c0_i32, %c128_i32 : i32
    %2 = tpu.assume_multiple %1, 128 : i32
    %3 = arith.index_cast %2 : i32 to index
    %c0 = arith.constant 0 : index
    %4 = vector.load %arg1[%3, %c0] : memref<128x128xf32, #tpu.memory_space<vmem>>, vector<128x128xf32>
    %5 = arith.mulf %4, %4 : vector<128x128xf32>
    %6 = vector.shape_cast %5 : vector<128x128xf32> to vector<16x8x128xf32>
    %cst_0 = arith.constant dense<0.000000e+00> : vector<8x128xf32>
    %7 = vector.multi_reduction <add>, %6, %cst_0 [0] : vector<16x8x128xf32> to vector<8x128xf32>
    %8 = arith.addf %0, %7 : vector<8x128xf32>
    %c1_i32 = arith.constant 1 : i32
    %c0_1 = arith.constant 0 : index
    %c0_2 = arith.constant 0 : index
    %9 = vector.load %arg2[%c0_1, %c0_2] : memref<8x128xf32, #tpu.memory_space<vmem>>, vector<8x128xf32>
    tpu.vector_store %arg2[%c0_1, %c0_2], %8 {strides = array<i32>} : memref<8x128xf32, #tpu.memory_space<vmem>>, vector<8x128xf32>,
    return
  }
  func.func @transform_0(%arg0: i32) -> (i32, i32) {
    %c0_i32 = arith.constant 0 : i32
    %c0_i32_0 = arith.constant 0 : i32
    return %arg0, %c0_i32 : i32, i32
  }
  func.func @transform_1(%arg0: i32) -> (i32, i32) {
    %c0_i32 = arith.constant 0 : i32
    %c0_i32_0 = arith.constant 0 : i32
    return %arg0, %c0_i32 : i32, i32
  }
}

</mosaic_0001>

<llo_original>
// kernel: tpu_custom_call.1
$region0: #{tpu_custom_call.1}
  #allocation0 [shape = 'u32[]', space=smem, size = 0x4, offset = 0x4, fixed_abs, tag = 'smem constant byte address 0x4 - core index']
  #allocation1 [shape = 'u32[144,128]{1,0:T(1,128)}', space=vmem, size = 0x12000, scoped, tag = 'internal scratch']
  %s0 = inlined_call_operand.hbm [shape: f32[256,128], index: 0, kind: input, shape index: {}]
  %s1 = inlined_call_operand.hbm [shape: f32[16,128], index: 1, kind: output, shape index: {}]
  %s2 = sld [smem:[#allocation0]]
  $region41: #{tpu_custom_call.1} parent=0
    _
  %s4 = ssub.s32 1, %s2
  %s5 = scalar_select 0, %s4, %s2
  $region1: #{tpu_custom_call.1} parent=0
    #allocation2 [shape = 'u8[131072]{0}', space=vmem, size = 0x20000, scoped, tag = 'input window, operand 0']
    #allocation3 [shape = 's32[2]{0}', space=sflag, size = 0x8, scoped, tag = 'scoped memory for tpu_custom_call.1']
    #allocation4 [shape = 's32[2]{0}', space=sflag, size = 0x8, scoped, tag = 'scoped memory for tpu_custom_call.1']
    #allocation5 [shape = 'u8[8192]{0}', space=vmem, size = 0x2000, scoped, tag = 'output window, operand 0']
    %6 = vsyncpa [#allocation3], 0
    %s7 = scalar_lea.sflag [#allocation3], 1
    %8 = vsyncpa %s7, 0
    %9 = vsyncpa [#allocation4], 0
    %s10 = scalar_lea.sflag [#allocation4], 1
    %11 = vsyncpa %s10, 0
    loop: start=0, step=1, limit=4
    $region2: #{tpu_custom_call.1} parent=1 // loop_pre_header
      _
    $region3: #{tpu_custom_call.1} parent=1 // loop_header
      %s13 = sphi 0, %s17
      %p14 = scmp.ge.s32.totalorder %s13, 4
      %s23 = sphi 0, %s25
      %s26 = sphi 0, %s23
      %s27 = sphi 0, %s26
      %s43 = sphi 0, %s27
      %s49 = sphi 0, %s51
      %s52 = sphi 0, %s49
      %s53 = sphi 0, %s52
      %s69 = sphi 0, %s53
    $region4: #{tpu_custom_call.1} parent=1 // loop_header_branch
      %16 = sbr.rel (%p14) target = $region8
    $region5: #{tpu_custom_call.1} parent=1 // loop_body
      %s18 = ssub.s32 %s13, 1
      %s19 = ssub.s32 %s13, 2
      %s20 = sadd.s32 %s13, 1
      %s21 = ssub.s32 %s13, %s20
      %p22 = scmp.eq.s32.totalorder %s21, 0
      %s24 = sadd.s32 %s23, 1
      %s25 = scalar_select %p22, %s23, %s24
      %p28 = pneg %p22
      %p29 = scmp.eq.s32.totalorder %s13, 1
      %p30 = por %p28, %p29
      %p31 = scmp.ne.s32.totalorder %s23, %s26
      %p32 = scmp.eq.s32.totalorder %s13, 0
      %p33 = por %p31, %p32
      %p34 = scmp.ne.s32.totalorder %s23, %s26
      %p35 = scmp.eq.s32.totalorder %s18, 1
      %p36 = por %p34, %p35
      %p37 = scmp.ne.s32.totalorder %s26, %s27
      %p38 = scmp.eq.s32.totalorder %s18, 0
      %p39 = por %p37, %p38
      %p40 = scmp.ne.s32.totalorder %s26, %s27
      %p41 = scmp.eq.s32.totalorder %s19, 1
      %p42 = por %p40, %p41
      %p44 = scmp.ne.s32.totalorder %s27, %s43
      %p45 = scmp.eq.s32.totalorder %s19, 0
      %p46 = por %p44, %p45
      %s47 = ssub.s32 %s13, %s20
      %p48 = scmp.eq.s32.totalorder %s47, 0
      %s50 = sadd.s32 %s49, 1
      %s51 = scalar_select %p48, %s49, %s50
      %p54 = pneg %p48
      %p55 = scmp.eq.s32.totalorder %s13, 1
      %p56 = por %p54, %p55
      %p57 = scmp.ne.s32.totalorder %s49, %s52
      %p58 = scmp.eq.s32.totalorder %s13, 0
      %p59 = por %p57, %p58
      %p60 = scmp.ne.s32.totalorder %s49, %s52
      %p61 = scmp.eq.s32.totalorder %s18, 1
      %p62 = por %p60, %p61
      %p63 = scmp.ne.s32.totalorder %s52, %s53
      %p64 = scmp.eq.s32.totalorder %s18, 0
      %p65 = por %p63, %p64
      %p66 = scmp.ne.s32.totalorder %s52, %s53
      %p67 = scmp.eq.s32.totalorder %s19, 1
      %p68 = por %p66, %p67
      %p70 = scmp.ne.s32.totalorder %s53, %s69
      %p71 = scmp.eq.s32.totalorder %s19, 0
      %p72 = por %p70, %p71
      %p73 = scmp.le.s32.totalorder 1, %s13
      %p74 = scmp.lt.s32.totalorder %s13, 3
      %p75 = pnand %p73, %p74
      %p76 = pneg %p75
      // Predicated region
      $region9: #{tpu_custom_call.1} parent=5 // pred_check
        _
      $region10: #{tpu_custom_call.1} parent=5 // pred_check_branch
        %78 = sbr.rel (%p75) target = $region12
      $region11: #{tpu_custom_call.1} parent=5 // pred_region
        %s79 = ssub.s32 %s13, 1
      $region12: #{tpu_custom_call.1} parent=5 // pred_fallthru
        _
      %p80 = scmp.lt.s32.totalorder %s13, 2
      // Predicated region
      $region13: #{tpu_custom_call.1} parent=5 // pred_check
        %p81 = pneg %p80
      $region14: #{tpu_custom_call.1} parent=5 // pred_check_branch
        %83 = sbr.rel (%p81) target = $region16
      $region15: #{tpu_custom_call.1} parent=5 // pred_region
        // Predicated region
        $region17: #{tpu_custom_call.1} parent=15 // pred_check
          %p84 = pneg %p33
        $region18: #{tpu_custom_call.1} parent=15 // pred_check_branch
          %86 = sbr.rel (%p84) target = $region20
        $region19: #{tpu_custom_call.1} parent=15 // pred_region
          %s87 = sand.u32 %s23, 1
          %s88 = scalar_lea.sflag [#allocation3], %s87
          %s89 = sand.u32 %s23, 1
          %s90 = smul.addr %s89, 128
          %s91 = scalar_lea.vmem [#allocation2], %s90
          %s92 = smul.u32 16, %s13
          %s94 = ssub.s32 2048, 2048
          %95 = vsyncadd %s88, %s94
          %s96 = smul.addr %s92, 128
          %s97 = scalar_lea.hbm %s0, %s96
          %s98 = sshll.u32 %s91, 4
          %s99 = int_to_ptr.vmem [resolvable:$true] %s98
          %104 = dma.hbm_to_vmem [thread:$0]  %s97, 2048, %s99, %s88, 128, 128, 8
        $region20: #{tpu_custom_call.1} parent=15 // pred_fallthru
          _
      $region16: #{tpu_custom_call.1} parent=5 // pred_fallthru
        _
      %p105 = scmp.le.s32.totalorder 1, %s13
      %p106 = scmp.lt.s32.totalorder %s13, 3
      %p107 = pnand %p105, %p106
      %p108 = pneg %p107
      // Predicated region
      $region21: #{tpu_custom_call.1} parent=5 // pred_check
        _
      $region22: #{tpu_custom_call.1} parent=5 // pred_check_branch
        %110 = sbr.rel (%p107) target = $region24
      $region23: #{tpu_custom_call.1} parent=5 // pred_region
        %s111 = ssub.s32 %s13, 1
        %s112 = sand.u32 %s26, 1
        %s113 = scalar_lea.sflag [#allocation3], %s112
        %s114 = sand.u32 %s26, 1
        %s115 = smul.addr %s114, 128
        %s116 = scalar_lea.vmem [#allocation2], %s115
        // Predicated region
        $region25: #{tpu_custom_call.1} parent=23 // pred_check
          %p117 = pneg %p39
        $region26: #{tpu_custom_call.1} parent=23 // pred_check_branch
          %119 = sbr.rel (%p117) target = $region28
        $region27: #{tpu_custom_call.1} parent=23 // pred_region
          %120 = dma.done %s113, 2048
        $region28: #{tpu_custom_call.1} parent=23 // pred_fallthru
          _
        %s121 = sand.u32 %s26, 1
        %s122 = scalar_lea.sflag [#allocation3], %s121
        %s123 = sand.u32 %s26, 1
        %s124 = smul.addr %s123, 128
        %s125 = scalar_lea.vmem [#allocation2], %s124
        %p126 = pneg %p39
        %p127 = pneg %p36
        %p128 = pneg %p65
        %p129 = pneg %p62
        %s130 = sand.u32 %s52, 1
        %s131 = scalar_lea.sflag [#allocation4], %s130
        %s132 = sand.u32 %s52, 1
        %s133 = smul.addr %s132, 8
        %s134 = scalar_lea.vmem [#allocation5], %s133
        %s135 = smul.u32 16, %s18
        %v136 = vld [vmem:[%s116] sm:$0xff]
        %v137 = vld [vmem:[%s116 + $0x8] sm:$0xff]
        %v138 = vld [vmem:[%s116 + $0x10] sm:$0xff]
        %v139 = vld [vmem:[%s116 + $0x18] sm:$0xff]
        %v140 = vld [vmem:[%s116 + $0x20] sm:$0xff]
        %v141 = vld [vmem:[%s116 + $0x28] sm:$0xff]
        %v142 = vld [vmem:[%s116 + $0x30] sm:$0xff]
        %v143 = vld [vmem:[%s116 + $0x38] sm:$0xff]
        %v144 = vld [vmem:[%s116 + $0x40] sm:$0xff]
        %v145 = vld [vmem:[%s116 + $0x48] sm:$0xff]
        %v146 = vld [vmem:[%s116 + $0x50] sm:$0xff]
        %v147 = vld [vmem:[%s116 + $0x58] sm:$0xff]
        %v148 = vld [vmem:[%s116 + $0x60] sm:$0xff]
        %v149 = vld [vmem:[%s116 + $0x68] sm:$0xff]
        %v150 = vld [vmem:[%s116 + $0x70] sm:$0xff]
        %v151 = vld [vmem:[%s116 + $0x78] sm:$0xff]
        %v152 = vmul.f32 %v136, %v136
        %v153 = vmul.f32 %v137, %v137
        %v154 = vmul.f32 %v138, %v138
        %v155 = vmul.f32 %v139, %v139
        %v156 = vmul.f32 %v140, %v140
        %v157 = vmul.f32 %v141, %v141
        %v158 = vmul.f32 %v142, %v142
        %v159 = vmul.f32 %v143, %v143
        %v160 = vmul.f32 %v144, %v144
        %v161 = vmul.f32 %v145, %v145
        %v162 = vmul.f32 %v146, %v146
        %v163 = vmul.f32 %v147, %v147
        %v164 = vmul.f32 %v148, %v148
        %v165 = vmul.f32 %v149, %v149
        %v166 = vmul.f32 %v150, %v150
        %v167 = vmul.f32 %v151, %v151
        %v168 = vadd.f32 %v152, %v153
        %v169 = vadd.f32 %v168, %v154
        %v170 = vadd.f32 %v169, %v155
        %v171 = vadd.f32 %v170, %v156
        %v172 = vadd.f32 %v171, %v157
        %v173 = vadd.f32 %v172, %v158
        %v174 = vadd.f32 %v173, %v159
        %v175 = vadd.f32 %v174, %v160
        %v176 = vadd.f32 %v175, %v161
        %v177 = vadd.f32 %v176, %v162
        %v178 = vadd.f32 %v177, %v163
        %v179 = vadd.f32 %v178, %v164
        %v180 = vadd.f32 %v179, %v165
        %v181 = vadd.f32 %v180, %v166
        %v182 = vadd.f32 %v181, %v167
        %v183 = vadd.f32 %v182, 0.0
        %184 = vst [vmem:[%s134] sm:$0xff] %v183
        %s185 = sand.u32 %s52, 1
        %s186 = scalar_lea.sflag [#allocation4], %s185
        %s187 = sand.u32 %s52, 1
        %s188 = smul.addr %s187, 8
        %s189 = scalar_lea.vmem [#allocation5], %s188
        // Predicated region
        $region29: #{tpu_custom_call.1} parent=23 // pred_check
          %p190 = pneg %p62
        $region30: #{tpu_custom_call.1} parent=23 // pred_check_branch
          %192 = sbr.rel (%p190) target = $region32
        $region31: #{tpu_custom_call.1} parent=23 // pred_region
          %s194 = ssub.s32 128, 128
          %195 = vsyncadd %s186, %s194
          %s196 = smul.addr %s18, 128
          %s197 = scalar_lea.hbm %s1, %s196
          %s199 = sshll.u32 %s189, 4
          %s200 = int_to_ptr.vmem [resolvable:$true] %s199
          %202 = dma.vmem_to_hbm [thread:$0]  %s200, 128, %s197, %s186
        $region32: #{tpu_custom_call.1} parent=23 // pred_fallthru
          _
      $region24: #{tpu_custom_call.1} parent=5 // pred_fallthru
        _
      %p203 = scmp.le.s32.totalorder 2, %s13
      // Predicated region
      $region33: #{tpu_custom_call.1} parent=5 // pred_check
        %p204 = pneg %p203
      $region34: #{tpu_custom_call.1} parent=5 // pred_check_branch
        %206 = sbr.rel (%p204) target = $region36
      $region35: #{tpu_custom_call.1} parent=5 // pred_region
        %s207 = ssub.s32 %s13, 2
        // Predicated region
        $region37: #{tpu_custom_call.1} parent=35 // pred_check
          %p208 = pneg %p68
        $region38: #{tpu_custom_call.1} parent=35 // pred_check_branch
          %210 = sbr.rel (%p208) target = $region40
        $region39: #{tpu_custom_call.1} parent=35 // pred_region
          %s211 = sand.u32 %s53, 1
          %s212 = scalar_lea.sflag [#allocation4], %s211
          %s213 = sand.u32 %s53, 1
          %s214 = smul.addr %s213, 8
          %s215 = scalar_lea.vmem [#allocation5], %s214
          %216 = dma.done %s212, 128
        $region40: #{tpu_custom_call.1} parent=35 // pred_fallthru
          _
      $region36: #{tpu_custom_call.1} parent=5 // pred_fallthru
        _
    $region6: #{tpu_custom_call.1} parent=1 // loop_footer
      %s17 = sadd.s32 1, %s13
    $region7: #{tpu_custom_call.1} parent=1 // loop_footer_branch
      %12 = sbr.rel target = $region3
    $region8: #{tpu_custom_call.1} parent=1 // loop_exit
      _
    %217 = vsyncpa [#allocation3], 1
    %s218 = scalar_lea.sflag [#allocation3], 1
    %219 = vsyncpa %s218, 1
    %220 = vsyncpa [#allocation4], 1
    %s221 = scalar_lea.sflag [#allocation4], 1
    %222 = vsyncpa %s221, 1

</llo_original>
